<compile_context>
chip_gen: v5e
topology: v5e:2x2
jax: 0.10.0
libtpu: 0.0.40
codegen_flags: <defaults>
</compile_context>

<pallas_src>
import functools

import jax
import jax.numpy as jnp
from jax.experimental import pallas as pl
from jax.experimental.pallas import tpu as pltpu


def _triplet_rowloss_kernel(a_ref, p_ref, n_ref, o_ref, *, margin, groups, group_d):
    a = a_ref[...].astype(jnp.float32)
    p = p_ref[...].astype(jnp.float32)
    n = n_ref[...].astype(jnp.float32)

    dp = a - p
    dn = a - n
    # Fused: sum((a-p)^2) - sum((a-n)^2) == sum((a-p)^2 - (a-n)^2)
    # -> one cross-lane (XLU) reduction per row group instead of two.
    diff = dp * dp - dn * dn                                  # (TB, groups*group_d)

    if groups == 1:
        gap = jnp.sum(diff, axis=1, keepdims=True)            # (TB, 1)
    else:
        # One original row per D-wide lane group (static lane slices only).
        gap = jnp.concatenate(
            [jnp.sum(diff[:, g * group_d:(g + 1) * group_d], axis=1, keepdims=True)
             for g in range(groups)],
            axis=1)                                           # (TB, groups)

    o_ref[...] = jnp.maximum(gap + margin, 0.0)               # per-row relu loss


def _round_up(x, m):
    return ((x + m - 1) // m) * m


def _vmem_limit_bytes():
    """Scoped-VMEM limit per generation: ~64 MiB on v5e/v6e (128 MiB physical),
    ~48 MiB on v7x (64 MiB physical per TC)."""
    try:
        phys = pltpu.get_tpu_info().vmem_capacity_bytes
    except Exception:
        phys = 64 * 1024 * 1024          # conservative: v7x per-TC VMEM
    return int(min(phys * 3 // 4, 64 * 1024 * 1024))


def _choose_tile_rows(n_rows, d_eff, in_itemsize, budget_bytes):
    """Pick a batch tile so the full working set (pipelined input blocks plus
    f32 upcast / compute temporaries) fits the VMEM budget, with >= 2 tiles on
    non-tiny batches so v7x can use both TensorCores."""
    if n_rows <= 8:
        return n_rows
    per_row = 3 * 2 * d_eff * in_itemsize        # 3 inputs, double-buffered
    if in_itemsize < 4:
        per_row += 3 * d_eff * 4                 # f32 upcast temporaries (bf16 in)
    per_row += 2 * d_eff * 4                     # dp/dn/diff live f32 temps
    tb = budget_bytes // max(per_row, 1)
    tb = min(tb, 8192)                           # well past the HBM-roofline knee
    tb = min(tb, (n_rows // 8) * 8)              # never (much) larger than batch
    if n_rows >= 16:
        # >= 2 grid steps so the "parallel" axis can feed both v7x TensorCores.
        tb = min(tb, _round_up(-(-n_rows // 2), 8))
    return max(8, (tb // 8) * 8)


def triplet_loss(anchor, positive, negative, margin=1.0, tile_b=None):
    """Pallas TPU implementation of TripletLoss.forward. Returns scalar f32."""
    assert anchor.shape == positive.shape == negative.shape
    assert anchor.dtype == positive.dtype == negative.dtype
    B, D = anchor.shape
    itemsize = jnp.dtype(anchor.dtype).itemsize

    # --- small-D lane folding (free contiguous reshape, no extra HBM pass) ---
    groups = 1
    if 8 <= D < 128 and 128 % D == 0 and B % (128 // D) == 0:
        groups = 128 // D
    n_rows = B // groups
    d_eff = D * groups
    if groups > 1:
        anchor = anchor.reshape(n_rows, d_eff)
        positive = positive.reshape(n_rows, d_eff)
        negative = negative.reshape(n_rows, d_eff)

    vmem_limit = _vmem_limit_bytes()

    # --- batch tile ---
    if tile_b is not None:
        if n_rows <= 8:
            tb = n_rows
        else:
            tb = max(8, (int(tile_b) // 8) * 8)
            tb = min(tb, (n_rows // 8) * 8)
    else:
        tb = _choose_tile_rows(n_rows, d_eff, itemsize,
                               budget_bytes=vmem_limit * 3 // 4)
    num_tiles = pl.cdiv(n_rows, tb)

    # Small-tile regime: a third input buffer hides exposed DMA issue latency.
    block_bytes = tb * d_eff * itemsize
    if num_tiles >= 3 and block_bytes < 128 * 1024:
        in_spec = pl.BlockSpec((tb, d_eff), lambda i: (i, 0),
                               pipeline_mode=pl.Buffered(3))
    else:
        in_spec = pl.BlockSpec((tb, d_eff), lambda i: (i, 0))

    kernel = functools.partial(_triplet_rowloss_kernel, margin=float(margin),
                               groups=groups, group_d=D)

    row_loss = pl.pallas_call(
        kernel,
        out_shape=jax.ShapeDtypeStruct((n_rows, groups), jnp.float32),
        grid=(num_tiles,),
        in_specs=[in_spec, in_spec, in_spec],
        out_specs=pl.BlockSpec((tb, groups), lambda i: (i, 0)),
        compiler_params=pltpu.CompilerParams(
            dimension_semantics=("parallel",),
            vmem_limit_bytes=vmem_limit),
    )(anchor, positive, negative)

    # Exactly one loss per real input row (ragged-tail writes are clipped by
    # Pallas), so a plain sum / B is the batch mean — no slicing/masking.
    return jnp.sum(row_loss) / B


def triplet_loss_ref(anchor, positive, negative, margin=1.0):
    a = anchor.astype(jnp.float32)
    p = positive.astype(jnp.float32)
    n = negative.astype(jnp.float32)
    pos_dist = jnp.sum((a - p) ** 2, axis=1)
    neg_dist = jnp.sum((a - n) ** 2, axis=1)
    return jnp.mean(jnp.maximum(pos_dist - neg_dist + margin, 0.0))


if __name__ == "__main__":
    key = jax.random.PRNGKey(0)
    k1, k2, k3, k4, k5, k6, k7, k8, k9 = jax.random.split(key, 9)

    # Case 1: small embedding batch (toy MNIST-embedding usage); exercises the
    # D=32 lane-folding path ((8,32) -> (2,128) lane-dense blocks).
    B, D = 8, 32
    anchor = jax.random.normal(k1, (B, D), dtype=jnp.float32)
    positive = jax.random.normal(k2, (B, D), dtype=jnp.float32)
    negative = jax.random.normal(k3, (B, D), dtype=jnp.float32)
    out = jax.block_until_ready(triplet_loss(anchor, positive, negative, margin=1.0))
    ref = triplet_loss_ref(anchor, positive, negative, margin=1.0)
    assert jnp.allclose(out, ref, atol=1e-5, rtol=1e-5), (out, ref)

    # Case 2: forced small tile -> ragged last block (200 % 64 != 0, no pad)
    # and the Buffered(3) small-tile pipeline path.
    B2, D2 = 200, 128
    a2 = jax.random.normal(k4, (B2, D2), dtype=jnp.float32)
    p2 = jax.random.normal(k5, (B2, D2), dtype=jnp.float32)
    n2 = jax.random.normal(k6, (B2, D2), dtype=jnp.float32)
    out2 = jax.block_until_ready(triplet_loss(a2, p2, n2, margin=0.5, tile_b=64))
    ref2 = triplet_loss_ref(a2, p2, n2, margin=0.5)
    assert jnp.allclose(out2, ref2, atol=1e-4, rtol=1e-4), (out2, ref2)

    # Case 3: bf16 inputs, auto tile (budget-driven TB, >=2 tiles, ragged tail).
    out3 = jax.block_until_ready(
        triplet_loss(a2.astype(jnp.bfloat16), p2.astype(jnp.bfloat16),
                     n2.astype(jnp.bfloat16), margin=0.5))
    assert jnp.allclose(out3, ref2, atol=5e-2, rtol=5e-2), (out3, ref2)

    # Case 4: small D where lane folding does NOT apply (B % (128//D) != 0),
    # plus a ragged batch (10 % 8 != 0) on the plain path.
    B4, D4 = 10, 32
    a4 = jax.random.normal(k7, (B4, D4), dtype=jnp.float32)
    p4 = jax.random.normal(k8, (B4, D4), dtype=jnp.float32)
    n4 = jax.random.normal(k9, (B4, D4), dtype=jnp.float32)
    out4 = jax.block_until_ready(triplet_loss(a4, p4, n4, margin=1.0))
    ref4 = triplet_loss_ref(a4, p4, n4, margin=1.0)
    assert jnp.allclose(out4, ref4, atol=1e-5, rtol=1e-5), (out4, ref4)

    print("KERNEL_OK")
</pallas_src>

<mosaic_0001>
module attributes {stable_mosaic.version = 11 : i64} {
  func.func @_triplet_rowloss_kernel(%arg0: i32, %arg1: memref<2x128xf32, #tpu.memory_space<vmem>>, %arg2: memref<2x128xf32, #tpu.memory_space<vmem>>, %arg3: memref<2x128xf32, #tpu.memory_space<vmem>>, %arg4: memref<2x4xf32, #tpu.memory_space<vmem>>) attributes {dimension_semantics = [#tpu.dimension_semantics<parallel>], iteration_bounds = array<i64: 1>, scalar_prefetch = 0 : i64, scratch_operands = 0 : i64, tpu.core_type = #tpu.core_type<tc>, window_params = [{transform_indices = @transform_0, window_bounds = array<i64: 2, 128>}, {transform_indices = @transform_1, window_bounds = array<i64: 2, 128>}, {transform_indices = @transform_2, window_bounds = array<i64: 2, 128>}, {transform_indices = @transform_3, window_bounds = array<i64: 2, 4>}]} {
    %c0 = arith.constant 0 : index
    %c0_0 = arith.constant 0 : index
    %0 = vector.load %arg1[%c0, %c0_0] : memref<2x128xf32, #tpu.memory_space<vmem>>, vector<2x128xf32>
    %c0_1 = arith.constant 0 : index
    %c0_2 = arith.constant 0 : index
    %1 = vector.load %arg2[%c0_1, %c0_2] : memref<2x128xf32, #tpu.memory_space<vmem>>, vector<2x128xf32>
    %c0_3 = arith.constant 0 : index
    %c0_4 = arith.constant 0 : index
    %2 = vector.load %arg3[%c0_3, %c0_4] : memref<2x128xf32, #tpu.memory_space<vmem>>, vector<2x128xf32>
    %3 = arith.subf %0, %1 : vector<2x128xf32>
    %4 = arith.subf %0, %2 : vector<2x128xf32>
    %5 = arith.mulf %3, %3 : vector<2x128xf32>
    %6 = arith.mulf %4, %4 : vector<2x128xf32>
    %7 = arith.subf %5, %6 : vector<2x128xf32>
    %8 = vector.extract_strided_slice %7 {offsets = [0, 0], sizes = [2, 32], strides = [1, 1]} : vector<2x128xf32> to vector<2x32xf32>
    %cst = arith.constant dense<0.000000e+00> : vector<2xf32>
    %9 = vector.multi_reduction <add>, %8, %cst [1] : vector<2x32xf32> to vector<2xf32>
    %10 = vector.shape_cast %9 : vector<2xf32> to vector<2x1xf32>
    %11 = vector.extract_strided_slice %7 {offsets = [0, 32], sizes = [2, 32], strides = [1, 1]} : vector<2x128xf32> to vector<2x32xf32>
    %cst_5 = arith.constant dense<0.000000e+00> : vector<2xf32>
    %12 = vector.multi_reduction <add>, %11, %cst_5 [1] : vector<2x32xf32> to vector<2xf32>
    %13 = vector.shape_cast %12 : vector<2xf32> to vector<2x1xf32>
    %14 = vector.extract_strided_slice %7 {offsets = [0, 64], sizes = [2, 32], strides = [1, 1]} : vector<2x128xf32> to vector<2x32xf32>
    %cst_6 = arith.constant dense<0.000000e+00> : vector<2xf32>
    %15 = vector.multi_reduction <add>, %14, %cst_6 [1] : vector<2x32xf32> to vector<2xf32>
    %16 = vector.shape_cast %15 : vector<2xf32> to vector<2x1xf32>
    %17 = vector.extract_strided_slice %7 {offsets = [0, 96], sizes = [2, 32], strides = [1, 1]} : vector<2x128xf32> to vector<2x32xf32>
    %cst_7 = arith.constant dense<0.000000e+00> : vector<2xf32>
    %18 = vector.multi_reduction <add>, %17, %cst_7 [1] : vector<2x32xf32> to vector<2xf32>
    %19 = vector.shape_cast %18 : vector<2xf32> to vector<2x1xf32>
    %20 = tpu.concatenate %10, %13, %16, %19 in 1 : vector<2x1xf32>, vector<2x1xf32>, vector<2x1xf32>, vector<2x1xf32> -> vector<2x4xf32>
    %cst_8 = arith.constant 1.000000e+00 : f32
    %21 = vector.broadcast %cst_8 : f32 to vector<2x4xf32>
    %22 = arith.addf %20, %21 : vector<2x4xf32>
    %cst_9 = arith.constant 0.000000e+00 : f32
    %23 = vector.broadcast %cst_9 : f32 to vector<2x4xf32>
    %24 = arith.maximumf %22, %23 : vector<2x4xf32>
    %c0_10 = arith.constant 0 : index
    %c0_11 = arith.constant 0 : index
    %25 = vector.load %arg4[%c0_10, %c0_11] : memref<2x4xf32, #tpu.memory_space<vmem>>, vector<2x4xf32>
    tpu.vector_store %arg4[%c0_10, %c0_11], %24 {strides = array<i32>} : memref<2x4xf32, #tpu.memory_space<vmem>>, vector<2x4xf32>,
    return
  }
  func.func @transform_0(%arg0: i32) -> (i32, i32) {
    %c0_i32 = arith.constant 0 : i32
    %c0_i32_0 = arith.constant 0 : i32
    return %arg0, %c0_i32 : i32, i32
  }
  func.func @transform_1(%arg0: i32) -> (i32, i32) {
    %c0_i32 = arith.constant 0 : i32
    %c0_i32_0 = arith.constant 0 : i32
    return %arg0, %c0_i32 : i32, i32
  }
  func.func @transform_2(%arg0: i32) -> (i32, i32) {
    %c0_i32 = arith.constant 0 : i32
    %c0_i32_0 = arith.constant 0 : i32
    return %arg0, %c0_i32 : i32, i32
  }
  func.func @transform_3(%arg0: i32) -> (i32, i32) {
    %c0_i32 = arith.constant 0 : i32
    %c0_i32_0 = arith.constant 0 : i32
    return %arg0, %c0_i32 : i32, i32
  }
}

</mosaic_0001>

<llo_original>
// kernel: tpu_custom_call.1
$region0: #{tpu_custom_call.1}
  #allocation0 [shape = 'u32[]', space=smem, size = 0x4, offset = 0x4, fixed_abs, tag = 'smem constant byte address 0x4 - core index']
  #allocation1 [shape = 'u32[72,128]{1,0:T(1,128)}', space=vmem, size = 0x9000, scoped, tag = 'internal scratch']
  %s0 = inlined_call_operand.hbm [shape: f32[2,128], index: 0, kind: input, shape index: {}]
  %s1 = inlined_call_operand.hbm [shape: f32[2,128], index: 1, kind: input, shape index: {}]
  %s2 = inlined_call_operand.hbm [shape: f32[2,128], index: 2, kind: input, shape index: {}]
  %s3 = inlined_call_operand.hbm [shape: f32[2,4], index: 3, kind: output, shape index: {}]
  %s4 = sld [smem:[#allocation0]]
  $region34: #{tpu_custom_call.1} parent=0
    _
  %s6 = ssub.s32 1, %s4
  %s7 = scalar_select 0, %s6, %s4
  $region1: #{tpu_custom_call.1} parent=0
    #allocation2 [shape = 'u8[1024]{0}', space=vmem, size = 0x400, scoped, tag = 'input window, operand 0, single buffered']
    #allocation3 [shape = 's32[1]{0}', space=sflag, size = 0x4, scoped, tag = 'scoped memory for tpu_custom_call.1']
    #allocation4 [shape = 's32[1]{0}', space=sflag, size = 0x4, scoped, tag = 'scoped memory for tpu_custom_call.1']
    #allocation5 [shape = 'u8[1024]{0}', space=vmem, size = 0x400, scoped, tag = 'input window, operand 1, single buffered']
    #allocation6 [shape = 's32[1]{0}', space=sflag, size = 0x4, scoped, tag = 'scoped memory for tpu_custom_call.1']
    #allocation7 [shape = 'u8[1024]{0}', space=vmem, size = 0x400, scoped, tag = 'input window, operand 2, single buffered']
    #allocation8 [shape = 'u8[1024]{0}', space=vmem, size = 0x400, scoped, tag = 'output window, operand 0, single buffered']
    %8 = vsyncpa [#allocation3], 0
    %9 = vsyncpa [#allocation6], 0
    %10 = vsyncpa [#allocation4], 0
    // Predicated region
    $region2: #{tpu_custom_call.1} parent=1 // pred_check
      _
    $region3: #{tpu_custom_call.1} parent=1 // pred_check_branch
      %12 = sbr.rel (0) target = $region5
    $region4: #{tpu_custom_call.1} parent=1 // pred_region
      %14 = vsyncadd [#allocation3], 0
      %s16 = sshll.u32 %s0, 4
      %s17 = int_to_ptr.hbm [resolvable:$true] %s16
      %s18 = sshll.u32 [#allocation2], 4
      %s19 = int_to_ptr.vmem [resolvable:$true] %s18
      %21 = dma.hbm_to_vmem [thread:$0]  %s17, 32, %s19, [#allocation3]
    $region5: #{tpu_custom_call.1} parent=1 // pred_fallthru
      _
    // Predicated region
    $region6: #{tpu_custom_call.1} parent=1 // pred_check
      _
    $region7: #{tpu_custom_call.1} parent=1 // pred_check_branch
      %23 = sbr.rel (0) target = $region9
    $region8: #{tpu_custom_call.1} parent=1 // pred_region
      %25 = vsyncadd [#allocation6], 0
      %s27 = sshll.u32 %s1, 4
      %s28 = int_to_ptr.hbm [resolvable:$true] %s27
      %s29 = sshll.u32 [#allocation5], 4
      %s30 = int_to_ptr.vmem [resolvable:$true] %s29
      %32 = dma.hbm_to_vmem [thread:$0]  %s28, 32, %s30, [#allocation6]
    $region9: #{tpu_custom_call.1} parent=1 // pred_fallthru
      _
    // Predicated region
    $region10: #{tpu_custom_call.1} parent=1 // pred_check
      _
    $region11: #{tpu_custom_call.1} parent=1 // pred_check_branch
      %34 = sbr.rel (0) target = $region13
    $region12: #{tpu_custom_call.1} parent=1 // pred_region
      %36 = vsyncadd [#allocation6], 0
      %s38 = sshll.u32 %s2, 4
      %s39 = int_to_ptr.hbm [resolvable:$true] %s38
      %s40 = sshll.u32 [#allocation7], 4
      %s41 = int_to_ptr.vmem [resolvable:$true] %s40
      %43 = dma.hbm_to_vmem [thread:$0]  %s39, 32, %s41, [#allocation6]
    $region13: #{tpu_custom_call.1} parent=1 // pred_fallthru
      _
    // Predicated region
    $region14: #{tpu_custom_call.1} parent=1 // pred_check
      _
    $region15: #{tpu_custom_call.1} parent=1 // pred_check_branch
      %45 = sbr.rel (0) target = $region17
    $region16: #{tpu_custom_call.1} parent=1 // pred_region
      %47 = dma.done [#allocation3], 32
    $region17: #{tpu_custom_call.1} parent=1 // pred_fallthru
      _
    // Predicated region
    $region18: #{tpu_custom_call.1} parent=1 // pred_check
      _
    $region19: #{tpu_custom_call.1} parent=1 // pred_check_branch
      %49 = sbr.rel (0) target = $region21
    $region20: #{tpu_custom_call.1} parent=1 // pred_region
      %51 = dma.done [#allocation6], 32
    $region21: #{tpu_custom_call.1} parent=1 // pred_fallthru
      _
    // Predicated region
    $region22: #{tpu_custom_call.1} parent=1 // pred_check
      _
    $region23: #{tpu_custom_call.1} parent=1 // pred_check_branch
      %53 = sbr.rel (0) target = $region25
    $region24: #{tpu_custom_call.1} parent=1 // pred_region
      %55 = dma.done [#allocation6], 32
    $region25: #{tpu_custom_call.1} parent=1 // pred_fallthru
      _
    %v56 = vld [vmem:[#allocation2] sm:$0x3]
    %v57 = vld [vmem:[#allocation5] sm:$0x3]
    %v58 = vld [vmem:[#allocation7] sm:$0x3]
    %v59 = vsub.f32 %v56, %v57
    %v60 = vsub.f32 %v56, %v58
    %v61 = vmul.f32 %v59, %v59
    %v62 = vmul.f32 %v60, %v60
    %v63 = vsub.f32 %v61, %v62
    %vm64 = vcmask 254976
    %v65 = vsel %vm64, %v63, 0.0
    %66 = vadd.xlane.f32.xlu0 %v65
    %v67 = vpop.xlane.xlu0 %66
    %69 = vrot.lane.b32.xlu0 %v63, 96
    %v70 = vpop.permute.xlu0 %69
    %v72 = vsel %vm64, %v70, 0.0
    %73 = vadd.xlane.f32.xlu0 %v72
    %v74 = vpop.xlane.xlu0 %73
    %75 = vrot.lane.b32.xlu0 %v63, 64
    %v76 = vpop.permute.xlu0 %75
    %v78 = vsel %vm64, %v76, 0.0
    %79 = vadd.xlane.f32.xlu0 %v78
    %v80 = vpop.xlane.xlu0 %79
    %81 = vrot.lane.b32.xlu0 %v63, 32
    %v82 = vpop.permute.xlu0 %81
    %v84 = vsel %vm64, %v82, 0.0
    %85 = vadd.xlane.f32.xlu0 %v84
    %v86 = vpop.xlane.xlu0 %85
    %vm87 = vcmask 7168
    %v88 = vsel %vm87, %v67, %v74
    %vm89 = vcmask 15360
    %v90 = vsel %vm89, %v88, %v80
    %vm91 = vcmask 23552
    %v92 = vsel %vm91, %v90, %v86
    %v93 = vadd.f32 %v92, 1.0
    %v94 = vmax.f32 %v93, 0.0
    %vm95 = vcmask 25600
    %96 = vst.msk [vmem:[#allocation8] sm:$0x3] %vm95, %v94
    // Predicated region
    $region26: #{tpu_custom_call.1} parent=1 // pred_check
      _
    $region27: #{tpu_custom_call.1} parent=1 // pred_check_branch
      %98 = sbr.rel (0) target = $region29
    $region28: #{tpu_custom_call.1} parent=1 // pred_region
      %100 = vsyncadd [#allocation4], 0
      %s102 = sshll.u32 [#allocation8], 4
      %s103 = int_to_ptr.vmem [resolvable:$true] %s102
      %s104 = sshll.u32 %s3, 4
      %s105 = int_to_ptr.hbm [resolvable:$true] %s104
      %107 = dma.vmem_to_hbm [thread:$0]  %s103, 32, %s105, [#allocation4]
    $region29: #{tpu_custom_call.1} parent=1 // pred_fallthru
      _
    // Predicated region
    $region30: #{tpu_custom_call.1} parent=1 // pred_check
      _
    $region31: #{tpu_custom_call.1} parent=1 // pred_check_branch
      %109 = sbr.rel (0) target = $region33
    $region32: #{tpu_custom_call.1} parent=1 // pred_region
      %111 = dma.done [#allocation4], 32
    $region33: #{tpu_custom_call.1} parent=1 // pred_fallthru
      _
    %112 = vsyncpa [#allocation3], 1
    %113 = vsyncpa [#allocation6], 1
    %114 = vsyncpa [#allocation4], 1

</llo_original>
